<compile_context>
chip_gen: v5e
topology: v5e:2x2
jax: 0.10.0
libtpu: 0.0.40
codegen_flags: <defaults>
</compile_context>

<pallas_src>
import functools

import jax
import jax.numpy as jnp
from jax import lax
from jax.experimental import pallas as pl
from jax.experimental.pallas import tpu as pltpu


def _temporal_shift_kernel(x_ref, o_ref, *, c, fold, direction):
    # x_ref / o_ref: (1, nt, hw_tile)
    x = x_ref[0]                                  # (nt, hw_tile)
    nt, hw = x.shape                              # static block dims
    # Per-row channel index within its segment (mask is constant along lanes).
    ch = lax.broadcasted_iota(jnp.int32, (nt, hw), 0) % c
    zero_seg = jnp.zeros((c, hw), x.dtype)

    if direction == "left":
        # row r of the shifted view = x[r + c]; last segment becomes zeros.
        nxt = jnp.concatenate([x[c:, :], zero_seg], axis=0)
        out = jnp.where(ch < fold, nxt, x)
    elif direction == "right":
        # row r of the shifted view = x[r - c]; first segment becomes zeros.
        prv = jnp.concatenate([zero_seg, x[: nt - c, :]], axis=0)
        out = jnp.where(ch < fold, prv, x)
    else:  # bidirectional
        nxt = jnp.concatenate([x[c:, :], zero_seg], axis=0)
        prv = jnp.concatenate([zero_seg, x[: nt - c, :]], axis=0)
        out = jnp.where(ch < fold, nxt, jnp.where(ch < 2 * fold, prv, x))

    o_ref[0] = out


def _pick_hw_tile(nt, hw, itemsize, budget_bytes=1 << 20):
    """Largest lane tile that (a) divides hw, (b) is a multiple of 128, and
    (c) keeps a single (nt, tile) block under the VMEM budget.  Falls back to
    the full hw extent if hw is not a multiple of 128 (still a legal block)."""
    if hw % 128 != 0:
        return hw
    best = None
    t = 128
    while t <= hw:
        if hw % t == 0 and (best is None or nt * t * itemsize <= budget_bytes):
            best = t
        t += 128
    return best


def temporal_shift(x, n_segment=4, n_div=8, direction="left"):
    """Pallas TemporalShift. x: (bz, nt, h, w) with nt % n_segment == 0."""
    bz, nt, h, w = x.shape
    if nt % n_segment != 0:
        raise ValueError(f"nt={nt} not divisible by n_segment={n_segment}")
    c = nt // n_segment
    fold = c // n_div
    hw = h * w

    # Free reshape (merges trailing dims, no data movement): lane-dense layout.
    x3 = x.reshape(bz, nt, hw)
    hw_tile = _pick_hw_tile(nt, hw, x.dtype.itemsize)
    grid = (bz, hw // hw_tile)

    kernel = functools.partial(_temporal_shift_kernel, c=c, fold=fold,
                               direction=direction)

    out3 = pl.pallas_call(
        kernel,
        out_shape=jax.ShapeDtypeStruct((bz, nt, hw), x.dtype),
        grid_spec=pltpu.PrefetchScalarGridSpec(
            num_scalar_prefetch=0,
            grid=grid,
            in_specs=[pl.BlockSpec((1, nt, hw_tile), lambda b, j: (b, 0, j))],
            out_specs=pl.BlockSpec((1, nt, hw_tile), lambda b, j: (b, 0, j)),
        ),
        compiler_params=pltpu.CompilerParams(
            dimension_semantics=("parallel", "parallel")),
    )(x3)
    return out3.reshape(bz, nt, h, w)


def _reference_shift(x, n_segment, n_div, direction):
    """Pure-JAX port of TemporalShift.shift (the PyTorch reference)."""
    bz, nt, h, w = x.shape
    c = nt // n_segment
    fold = c // n_div
    xs = x.reshape(bz, n_segment, c, h, w)
    out = jnp.zeros_like(xs)
    if direction == "left":
        out = out.at[:, :-1, :fold].set(xs[:, 1:, :fold])
        out = out.at[:, :, fold:].set(xs[:, :, fold:])
    elif direction == "right":
        out = out.at[:, 1:, :fold].set(xs[:, :-1, :fold])
        out = out.at[:, :, fold:].set(xs[:, :, fold:])
    else:
        out = out.at[:, :-1, :fold].set(xs[:, 1:, :fold])
        out = out.at[:, 1:, fold:2 * fold].set(xs[:, :-1, fold:2 * fold])
        out = out.at[:, :, 2 * fold:].set(xs[:, :, 2 * fold:])
    return out.reshape(bz, nt, h, w)


if __name__ == "__main__":
    # TemporalShift(n_segment=4, n_div=8, direction='left') — default config.
    BZ, N_SEGMENT, N_DIV = 2, 4, 8
    C_PER_SEG, H, W = 8, 16, 16          # fold = 8 // 8 = 1
    NT = N_SEGMENT * C_PER_SEG           # 32 "temporal-folded" channels

    key = jax.random.PRNGKey(0)
    x = jax.random.normal(key, (BZ, NT, H, W), dtype=jnp.float32)

    # Default direction ('left') is the module's configured path; also exercise
    # the other two static branches for correctness.
    for direction in ("left", "right", "bidirectional"):
        out = jax.block_until_ready(
            temporal_shift(x, n_segment=N_SEGMENT, n_div=N_DIV,
                           direction=direction))
        ref = _reference_shift(x, N_SEGMENT, N_DIV, direction)
        assert out.shape == x.shape
        assert jnp.array_equal(out, ref), f"mismatch for direction={direction}"

    print("KERNEL_OK")
</pallas_src>

<mosaic_0001>
module attributes {stable_mosaic.version = 11 : i64} {
  func.func @_temporal_shift_kernel(%arg0: i32, %arg1: i32, %arg2: memref<1x32x256xf32, #tpu.memory_space<vmem>>, %arg3: memref<1x32x256xf32, #tpu.memory_space<vmem>>) attributes {dimension_semantics = [#tpu.dimension_semantics<parallel>, #tpu.dimension_semantics<parallel>], iteration_bounds = array<i64: 2, 1>, scalar_prefetch = 0 : i64, scratch_operands = 0 : i64, tpu.core_type = #tpu.core_type<tc>, window_params = [{transform_indices = @transform_0, window_bounds = array<i64: 1, 32, 256>}, {transform_indices = @transform_1, window_bounds = array<i64: 1, 32, 256>}]} {
    %c0 = arith.constant 0 : index
    %c0_0 = arith.constant 0 : index
    %c0_1 = arith.constant 0 : index
    %0 = vector.load %arg2[%c0, %c0_0, %c0_1] : memref<1x32x256xf32, #tpu.memory_space<vmem>>, vector<1x32x256xf32>
    %1 = vector.shape_cast %0 : vector<1x32x256xf32> to vector<32x256xf32>
    %2 = tpu.iota {dimensions = array<i32: 0>} : vector<32x256xi32>
    %c8_i32 = arith.constant 8 : i32
    %c0_i32 = arith.constant 0 : i32
    %3 = arith.cmpi eq, %c8_i32, %c0_i32 : i32
    %c1_i32 = arith.constant 1 : i32
    %4 = arith.select %3, %c1_i32, %c8_i32 : i32
    %5 = vector.broadcast %4 : i32 to vector<32x256xi32>
    %6 = arith.remsi %2, %5 : vector<32x256xi32>
    %c0_i32_2 = arith.constant 0 : i32
    %7 = vector.broadcast %c0_i32_2 : i32 to vector<32x256xi32>
    %8 = arith.cmpi ne, %6, %7 : vector<32x256xi32>
    %c0_i32_3 = arith.constant 0 : i32
    %9 = vector.broadcast %c0_i32_3 : i32 to vector<32x256xi32>
    %10 = arith.cmpi slt, %6, %9 : vector<32x256xi32>
    %c0_i32_4 = arith.constant 0 : i32
    %11 = arith.cmpi slt, %4, %c0_i32_4 : i32
    %12 = vector.broadcast %11 : i1 to vector<32x256xi1>
    %13 = vector.broadcast %12 : vector<32x256xi1> to vector<32x256xi1>
    %14 = arith.xori %10, %13 : vector<32x256xi1>
    %15 = arith.andi %14, %8 : vector<32x256xi1>
    %16 = vector.broadcast %4 : i32 to vector<32x256xi32>
    %17 = arith.addi %6, %16 : vector<32x256xi32>
    %18 = arith.select %15, %17, %6 : vector<32x256xi1>, vector<32x256xi32>
    %cst = arith.constant 0.000000e+00 : f32
    %19 = vector.broadcast %cst : f32 to vector<8x256xf32>
    %20 = vector.extract_strided_slice %1 {offsets = [8, 0], sizes = [24, 256], strides = [1, 1]} : vector<32x256xf32> to vector<24x256xf32>
    %21 = tpu.concatenate %20, %19 in 0 : vector<24x256xf32>, vector<8x256xf32> -> vector<32x256xf32>
    %c1_i32_5 = arith.constant 1 : i32
    %22 = vector.broadcast %c1_i32_5 : i32 to vector<32x256xi32>
    %23 = arith.cmpi slt, %18, %22 : vector<32x256xi32>
    %24 = arith.select %23, %21, %1 : vector<32x256xi1>, vector<32x256xf32>
    %c0_6 = arith.constant 0 : index
    %c0_7 = arith.constant 0 : index
    %c0_8 = arith.constant 0 : index
    %25 = vector.load %arg3[%c0_6, %c0_7, %c0_8] : memref<1x32x256xf32, #tpu.memory_space<vmem>>, vector<1x32x256xf32>
    %26 = vector.shape_cast %25 : vector<1x32x256xf32> to vector<32x256xf32>
    %27 = vector.shape_cast %24 : vector<32x256xf32> to vector<1x32x256xf32>
    tpu.vector_store %arg3[%c0_6, %c0_7, %c0_8], %27 {strides = array<i32>} : memref<1x32x256xf32, #tpu.memory_space<vmem>>, vector<1x32x256xf32>,
    return
  }
  func.func @transform_0(%arg0: i32, %arg1: i32) -> (i32, i32, i32) {
    %c0_i32 = arith.constant 0 : i32
    %c0_i32_0 = arith.constant 0 : i32
    return %arg0, %c0_i32, %arg1 : i32, i32, i32
  }
  func.func @transform_1(%arg0: i32, %arg1: i32) -> (i32, i32, i32) {
    %c0_i32 = arith.constant 0 : i32
    %c0_i32_0 = arith.constant 0 : i32
    return %arg0, %c0_i32, %arg1 : i32, i32, i32
  }
}

</mosaic_0001>

<llo_original>
// kernel: tpu_custom_call.1
$region0: #{tpu_custom_call.1}
  #allocation0 [shape = 'u32[]', space=smem, size = 0x4, offset = 0x4, fixed_abs, tag = 'smem constant byte address 0x4 - core index']
  #allocation1 [shape = 'u32[72,128]{1,0:T(1,128)}', space=vmem, size = 0x9000, scoped, tag = 'internal scratch']
  %s0 = inlined_call_operand.hbm [shape: f32[2,32,256], index: 0, kind: input, shape index: {}]
  %s1 = inlined_call_operand.hbm [shape: f32[2,32,256], index: 1, kind: output, shape index: {}]
  %s2 = sld [smem:[#allocation0]]
  $region41: #{tpu_custom_call.1} parent=0
    _
  %s4 = ssub.s32 1, %s2
  %s5 = scalar_select 0, %s4, %s2
  $region1: #{tpu_custom_call.1} parent=0
    #allocation2 [shape = 'u8[65536]{0}', space=vmem, size = 0x10000, scoped, tag = 'input window, operand 0']
    #allocation3 [shape = 's32[2]{0}', space=sflag, size = 0x8, scoped, tag = 'scoped memory for tpu_custom_call.1']
    #allocation4 [shape = 's32[2]{0}', space=sflag, size = 0x8, scoped, tag = 'scoped memory for tpu_custom_call.1']
    #allocation5 [shape = 'u8[65536]{0}', space=vmem, size = 0x10000, scoped, tag = 'output window, operand 0']
    %6 = vsyncpa [#allocation3], 0
    %s7 = scalar_lea.sflag [#allocation3], 1
    %8 = vsyncpa %s7, 0
    %9 = vsyncpa [#allocation4], 0
    %s10 = scalar_lea.sflag [#allocation4], 1
    %11 = vsyncpa %s10, 0
    loop: start=0, step=1, limit=4
    $region2: #{tpu_custom_call.1} parent=1 // loop_pre_header
      _
    $region3: #{tpu_custom_call.1} parent=1 // loop_header
      %s13 = sphi 0, %s17
      %p14 = scmp.ge.s32.totalorder %s13, 4
      %s20 = sphi 0, %s32
      %s21 = sphi 0, %s28
      %s22 = sphi 0, %s20
      %s23 = sphi 0, %s21
      %s24 = sphi 0, %s22
      %s25 = sphi 0, %s23
      %s37 = sphi 0, %s39
      %s40 = sphi 0, %s37
      %s41 = sphi 0, %s40
      %s57 = sphi 0, %s41
      %s65 = sphi 0, %s67
      %s68 = sphi 0, %s65
      %s69 = sphi 0, %s68
      %s85 = sphi 0, %s69
    $region4: #{tpu_custom_call.1} parent=1 // loop_header_branch
      %16 = sbr.rel (%p14) target = $region8
    $region5: #{tpu_custom_call.1} parent=1 // loop_body
      %s18 = ssub.s32 %s13, 1
      %s19 = ssub.s32 %s13, 2
      %s26 = sadd.s32 1, %s21
      %p27 = scmp.ge.s32.totalorder %s26, 1
      %s28 = scalar_select %p27, 0, %s26
      %s29 = sadd.s32 1, %s20
      %s30 = scalar_select %p27, %s29, %s20
      %p31 = scmp.ge.s32.totalorder %s30, 2
      %s32 = scalar_select %p31, 0, %s30
      %s33 = ssub.s32 %s20, %s32
      %s34 = ssub.s32 %s21, %s28
      %s35 = sor.u32 %s33, %s34
      %p36 = scmp.eq.s32.totalorder %s35, 0
      %s38 = sadd.s32 %s37, 1
      %s39 = scalar_select %p36, %s37, %s38
      %p42 = pneg %p36
      %p43 = scmp.eq.s32.totalorder %s13, 1
      %p44 = por %p42, %p43
      %p45 = scmp.ne.s32.totalorder %s37, %s40
      %p46 = scmp.eq.s32.totalorder %s13, 0
      %p47 = por %p45, %p46
      %p48 = scmp.ne.s32.totalorder %s37, %s40
      %p49 = scmp.eq.s32.totalorder %s18, 1
      %p50 = por %p48, %p49
      %p51 = scmp.ne.s32.totalorder %s40, %s41
      %p52 = scmp.eq.s32.totalorder %s18, 0
      %p53 = por %p51, %p52
      %p54 = scmp.ne.s32.totalorder %s40, %s41
      %p55 = scmp.eq.s32.totalorder %s19, 1
      %p56 = por %p54, %p55
      %p58 = scmp.ne.s32.totalorder %s41, %s57
      %p59 = scmp.eq.s32.totalorder %s19, 0
      %p60 = por %p58, %p59
      %s61 = ssub.s32 %s20, %s32
      %s62 = ssub.s32 %s21, %s28
      %s63 = sor.u32 %s61, %s62
      %p64 = scmp.eq.s32.totalorder %s63, 0
      %s66 = sadd.s32 %s65, 1
      %s67 = scalar_select %p64, %s65, %s66
      %p70 = pneg %p64
      %p71 = scmp.eq.s32.totalorder %s13, 1
      %p72 = por %p70, %p71
      %p73 = scmp.ne.s32.totalorder %s65, %s68
      %p74 = scmp.eq.s32.totalorder %s13, 0
      %p75 = por %p73, %p74
      %p76 = scmp.ne.s32.totalorder %s65, %s68
      %p77 = scmp.eq.s32.totalorder %s18, 1
      %p78 = por %p76, %p77
      %p79 = scmp.ne.s32.totalorder %s68, %s69
      %p80 = scmp.eq.s32.totalorder %s18, 0
      %p81 = por %p79, %p80
      %p82 = scmp.ne.s32.totalorder %s68, %s69
      %p83 = scmp.eq.s32.totalorder %s19, 1
      %p84 = por %p82, %p83
      %p86 = scmp.ne.s32.totalorder %s69, %s85
      %p87 = scmp.eq.s32.totalorder %s19, 0
      %p88 = por %p86, %p87
      %p89 = scmp.le.s32.totalorder 1, %s13
      %p90 = scmp.lt.s32.totalorder %s13, 3
      %p91 = pnand %p89, %p90
      %p92 = pneg %p91
      // Predicated region
      $region9: #{tpu_custom_call.1} parent=5 // pred_check
        _
      $region10: #{tpu_custom_call.1} parent=5 // pred_check_branch
        %94 = sbr.rel (%p91) target = $region12
      $region11: #{tpu_custom_call.1} parent=5 // pred_region
        %s95 = ssub.s32 %s13, 1
      $region12: #{tpu_custom_call.1} parent=5 // pred_fallthru
        _
      %p96 = scmp.lt.s32.totalorder %s13, 2
      // Predicated region
      $region13: #{tpu_custom_call.1} parent=5 // pred_check
        %p97 = pneg %p96
      $region14: #{tpu_custom_call.1} parent=5 // pred_check_branch
        %99 = sbr.rel (%p97) target = $region16
      $region15: #{tpu_custom_call.1} parent=5 // pred_region
        // Predicated region
        $region17: #{tpu_custom_call.1} parent=15 // pred_check
          %p100 = pneg %p47
        $region18: #{tpu_custom_call.1} parent=15 // pred_check_branch
          %102 = sbr.rel (%p100) target = $region20
        $region19: #{tpu_custom_call.1} parent=15 // pred_region
          %s103 = sand.u32 %s37, 1
          %s104 = scalar_lea.sflag [#allocation3], %s103
          %s105 = sand.u32 %s37, 1
          %s106 = smul.addr %s105, 64
          %s107 = scalar_lea.vmem [#allocation2], %s106
          %s108 = smul.u32 2, %s21
          %110 = vsyncadd %s104, 0
          %s111 = smul.addr %s20, 8
          %s112 = sadd.s32 %s108, %s111
          %s113 = smul.addr %s112, 8
          %s114 = scalar_lea.hbm %s0, %s113
          %s115 = sshll.u32 %s114, 4
          %s116 = int_to_ptr.hbm [resolvable:$true] %s115
          %s117 = sshll.u32 %s107, 4
          %s118 = int_to_ptr.vmem [resolvable:$true] %s117
          %123 = dma.hbm_to_vmem [thread:$0]  %s116, 1024, %s118, %s104, 256, 256, 16
        $region20: #{tpu_custom_call.1} parent=15 // pred_fallthru
          _
      $region16: #{tpu_custom_call.1} parent=5 // pred_fallthru
        _
      %p124 = scmp.le.s32.totalorder 1, %s13
      %p125 = scmp.lt.s32.totalorder %s13, 3
      %p126 = pnand %p124, %p125
      %p127 = pneg %p126
      // Predicated region
      $region21: #{tpu_custom_call.1} parent=5 // pred_check
        _
      $region22: #{tpu_custom_call.1} parent=5 // pred_check_branch
        %129 = sbr.rel (%p126) target = $region24
      $region23: #{tpu_custom_call.1} parent=5 // pred_region
        %s130 = ssub.s32 %s13, 1
        %s131 = sand.u32 %s40, 1
        %s132 = scalar_lea.sflag [#allocation3], %s131
        %s133 = sand.u32 %s40, 1
        %s134 = smul.addr %s133, 64
        %s135 = scalar_lea.vmem [#allocation2], %s134
        // Predicated region
        $region25: #{tpu_custom_call.1} parent=23 // pred_check
          %p136 = pneg %p53
        $region26: #{tpu_custom_call.1} parent=23 // pred_check_branch
          %138 = sbr.rel (%p136) target = $region28
        $region27: #{tpu_custom_call.1} parent=23 // pred_region
          %140 = dma.done %s132, 1024
        $region28: #{tpu_custom_call.1} parent=23 // pred_fallthru
          _
        %s141 = sand.u32 %s40, 1
        %s142 = scalar_lea.sflag [#allocation3], %s141
        %s143 = sand.u32 %s40, 1
        %s144 = smul.addr %s143, 64
        %s145 = scalar_lea.vmem [#allocation2], %s144
        %p146 = pneg %p53
        %p147 = pneg %p50
        %p148 = pneg %p81
        %p149 = pneg %p78
        %s150 = sand.u32 %s68, 1
        %s151 = scalar_lea.sflag [#allocation4], %s150
        %s152 = sand.u32 %s68, 1
        %s153 = smul.addr %s152, 64
        %s154 = scalar_lea.vmem [#allocation5], %s153
        %s155 = smul.u32 2, %s23
        %s156 = smul.u32 2, %s23
        %v157 = vld [vmem:[%s135] sm:$0xff]
        %v158 = vld [vmem:[%s135 + $0x8] sm:$0xff]
        %v159 = vld [vmem:[%s135 + $0x10] sm:$0xff]
        %v160 = vld [vmem:[%s135 + $0x18] sm:$0xff]
        %v161 = vld [vmem:[%s135 + $0x20] sm:$0xff]
        %v162 = vld [vmem:[%s135 + $0x28] sm:$0xff]
        %v163 = vld [vmem:[%s135 + $0x30] sm:$0xff]
        %v164 = vld [vmem:[%s135 + $0x38] sm:$0xff]
        %v165 = vlaneseq
        %v166 = vshrl.u32 %v165, 7
        %v167 = vadd.s32 %v166, 8
        %v168 = vadd.s32 %v166, 16
        %v169 = vadd.s32 %v166, 24
        %vm170 = vcmp.lt.s32.totalorder %v166, 0
        %v171 = vsub.s32 0, %v166
        %v172 = vsel %vm170, %v171, %v166
        %v173 = vshrl.u32 %v172, 3
        %v174 = vand.u32 %v172, 7
        %v175 = vsub.s32 0, %v174
        %v176 = vsel %vm170, %v175, %v174
        %vm177 = vcmp.lt.s32.totalorder %v167, 0
        %v178 = vsub.s32 0, %v167
        %v179 = vsel %vm177, %v178, %v167
        %v180 = vshrl.u32 %v179, 3
        %v181 = vand.u32 %v179, 7
        %v182 = vsub.s32 0, %v181
        %v183 = vsel %vm177, %v182, %v181
        %vm184 = vcmp.lt.s32.totalorder %v168, 0
        %v185 = vsub.s32 0, %v168
        %v186 = vsel %vm184, %v185, %v168
        %v187 = vshrl.u32 %v186, 3
        %v188 = vand.u32 %v186, 7
        %v189 = vsub.s32 0, %v188
        %v190 = vsel %vm184, %v189, %v188
        %vm191 = vcmp.lt.s32.totalorder %v169, 0
        %v192 = vsub.s32 0, %v169
        %v193 = vsel %vm191, %v192, %v169
        %v194 = vshrl.u32 %v193, 3
        %v195 = vand.u32 %v193, 7
        %v196 = vsub.s32 0, %v195
        %v197 = vsel %vm191, %v196, %v195
        %vm198 = vcmp.ne.s32.totalorder %v176, 0
        %vm199 = vcmp.ne.s32.totalorder %v183, 0
        %vm200 = vcmp.ne.s32.totalorder %v190, 0
        %vm201 = vcmp.ne.s32.totalorder %v197, 0
        %vm202 = vcmp.lt.s32.totalorder %v176, 0
        %vm203 = vcmp.lt.s32.totalorder %v183, 0
        %vm204 = vcmp.lt.s32.totalorder %v190, 0
        %vm205 = vcmp.lt.s32.totalorder %v197, 0
        %vm206 = vmand %vm202, %vm198
        %vm207 = vmand %vm203, %vm199
        %vm208 = vmand %vm204, %vm200
        %vm209 = vmand %vm205, %vm201
        %v210 = vadd.s32 %v176, 8
        %v211 = vadd.s32 %v183, 8
        %v212 = vadd.s32 %v190, 8
        %v213 = vadd.s32 %v197, 8
        %v214 = vsel %vm206, %v210, %v176
        %v215 = vsel %vm207, %v211, %v183
        %v216 = vsel %vm208, %v212, %v190
        %v217 = vsel %vm209, %v213, %v197
        %vm218 = vcmp.lt.s32.totalorder %v214, 1
        %vm219 = vcmp.lt.s32.totalorder %v215, 1
        %vm220 = vcmp.lt.s32.totalorder %v216, 1
        %vm221 = vcmp.lt.s32.totalorder %v217, 1
        %v222 = vsel %vm218, %v159, %v157
        %v223 = vsel %vm218, %v160, %v158
        %v224 = vsel %vm219, %v161, %v159
        %v225 = vsel %vm219, %v162, %v160
        %v226 = vsel %vm220, %v163, %v161
        %v227 = vsel %vm220, %v164, %v162
        %v228 = vsel %vm221, 0.0, %v163
        %v229 = vsel %vm221, 0.0, %v164
        %230 = vst [vmem:[%s154] sm:$0xff] %v222
        %231 = vst [vmem:[%s154 + $0x8] sm:$0xff] %v223
        %232 = vst [vmem:[%s154 + $0x10] sm:$0xff] %v224
        %233 = vst [vmem:[%s154 + $0x18] sm:$0xff] %v225
        %234 = vst [vmem:[%s154 + $0x20] sm:$0xff] %v226
        %235 = vst [vmem:[%s154 + $0x28] sm:$0xff] %v227
        %236 = vst [vmem:[%s154 + $0x30] sm:$0xff] %v228
        %237 = vst [vmem:[%s154 + $0x38] sm:$0xff] %v229
        %s238 = sand.u32 %s68, 1
        %s239 = scalar_lea.sflag [#allocation4], %s238
        %s240 = sand.u32 %s68, 1
        %s241 = smul.addr %s240, 64
        %s242 = scalar_lea.vmem [#allocation5], %s241
        // Predicated region
        $region29: #{tpu_custom_call.1} parent=23 // pred_check
          %p243 = pneg %p78
        $region30: #{tpu_custom_call.1} parent=23 // pred_check_branch
          %245 = sbr.rel (%p243) target = $region32
        $region31: #{tpu_custom_call.1} parent=23 // pred_region
          %s246 = smul.u32 2, %s23
          %248 = vsyncadd %s239, 0
          %s249 = smul.addr %s22, 8
          %s250 = sadd.s32 %s246, %s249
          %s251 = smul.addr %s250, 8
          %s252 = scalar_lea.hbm %s1, %s251
          %s253 = sshll.u32 %s242, 4
          %s254 = int_to_ptr.vmem [resolvable:$true] %s253
          %s255 = sshll.u32 %s252, 4
          %s256 = int_to_ptr.hbm [resolvable:$true] %s255
          %261 = dma.vmem_to_hbm [thread:$0]  %s254, 1024, %s256, %s239, 256, 256, 16
        $region32: #{tpu_custom_call.1} parent=23 // pred_fallthru
          _
      $region24: #{tpu_custom_call.1} parent=5 // pred_fallthru
        _
      %p262 = scmp.le.s32.totalorder 2, %s13
      // Predicated region
      $region33: #{tpu_custom_call.1} parent=5 // pred_check
        %p263 = pneg %p262
      $region34: #{tpu_custom_call.1} parent=5 // pred_check_branch
        %265 = sbr.rel (%p263) target = $region36
      $region35: #{tpu_custom_call.1} parent=5 // pred_region
        %s266 = ssub.s32 %s13, 2
        // Predicated region
        $region37: #{tpu_custom_call.1} parent=35 // pred_check
          %p267 = pneg %p84
        $region38: #{tpu_custom_call.1} parent=35 // pred_check_branch
          %269 = sbr.rel (%p267) target = $region40
        $region39: #{tpu_custom_call.1} parent=35 // pred_region
          %s270 = sand.u32 %s69, 1
          %s271 = scalar_lea.sflag [#allocation4], %s270
          %s272 = sand.u32 %s69, 1
          %s273 = smul.addr %s272, 64
          %s274 = scalar_lea.vmem [#allocation5], %s273
          %276 = dma.done %s271, 1024
        $region40: #{tpu_custom_call.1} parent=35 // pred_fallthru
          _
      $region36: #{tpu_custom_call.1} parent=5 // pred_fallthru
        _
    $region6: #{tpu_custom_call.1} parent=1 // loop_footer
      %s17 = sadd.s32 1, %s13
    $region7: #{tpu_custom_call.1} parent=1 // loop_footer_branch
      %12 = sbr.rel target = $region3
    $region8: #{tpu_custom_call.1} parent=1 // loop_exit
      _
    %277 = vsyncpa [#allocation3], 1
    %s278 = scalar_lea.sflag [#allocation3], 1
    %279 = vsyncpa %s278, 1
    %280 = vsyncpa [#allocation4], 1
    %s281 = scalar_lea.sflag [#allocation4], 1
    %282 = vsyncpa %s281, 1

</llo_original>
